<compile_context>
chip_gen: v5e
topology: v5e:2x2
jax: 0.10.0
libtpu: 0.0.40
codegen_flags: <defaults>
</compile_context>

<pallas_src>
import jax
import jax.numpy as jnp
from jax.experimental import pallas as pl
from jax.experimental.pallas import tpu as pltpu


def _round_up(x, m):
    return (x + m - 1) // m * m


def _vmem_capacity_bytes():
    try:
        return int(pltpu.get_tpu_info().vmem_capacity_bytes)
    except Exception:
        return 64 << 20  # conservative fallback (v7x per-TensorCore VMEM)


def _per_row_vmem_bytes(S, D, A, x_bytes):
    """Estimated VMEM bytes per (b, t) group row in one grid step, counting lane
    padding, the pipeline's double-buffered input/output blocks, and the live
    in-kernel intermediates."""
    Dl = _round_up(D, 128)
    Al = _round_up(A, 128)
    return (S * (2 * Dl * x_bytes      # x input block (2 pipeline buffers)
                 + 2 * Dl * 4          # f32 view of x + alpha*x product
                 + Al * 4              # u = tanh(x @ Wu^T + bu), f32
                 + 3 * 128 * 4)        # v / exp / alpha (TBT, S, 1) columns
            + 2 * Dl * 4)              # (tbt, D) output block (2 buffers)


def _choose_block_rows(G, per_row_bytes, budget, force=None):
    """Rows of (b, t) groups per grid step.  Always a multiple of 8 or equal to G
    (full extent) so the (tbt, D) output BlockSpec satisfies the (8,128) rule."""
    if G < 8:
        return G
    if force is not None:
        tbt = max(8, min(int(force), G))
        if tbt != G:
            tbt = (tbt // 8) * 8
        return tbt

    target = max(8, budget // max(1, per_row_bytes))
    target = min(target, 2048)              # bound vreg pressure / compile size
    if G >= 16:
        target = min(target, -(-G // 2))    # >= 2 grid steps (v7x: 2 TCs/chip)
    if target >= G:
        return G

    tbt_cdiv = max(8, (min(target, G) // 8) * 8)
    if G % 8 == 0:
        best_div = 8
        for cand in range(8, min(target, G) + 1, 8):
            if G % cand == 0:
                best_div = cand
        # Prefer an exact divisor (no partial tail block) unless it is much
        # smaller than the footprint-limited target.
        if best_div * 2 >= tbt_cdiv:
            return best_div
    return tbt_cdiv


def _sum_attention_kernel(x_ref, wu_ref, bu_ref, wv_ref, o_ref):
    # x_ref : (TBT, S, D)   TBT (b, t) groups per grid step (x's native dtype)
    # wu_ref: (D, Ap)       W_u^T, zero-padded A lanes, dtype == x dtype
    # bu_ref: (1, Ap)       b_u (f32, zero-padded)
    # wv_ref: (1, Ap)       w_v row (f32, zero-padded)
    # o_ref : (TBT, D)
    tbt, S, D = x_ref.shape

    x3 = x_ref[...]                                   # (TBT, S, D)
    # Free sublane fold when S is a multiple of the pack (8 for f32, 16 for bf16);
    # otherwise Mosaic inserts a relayout copy (perf only, not correctness).
    x2 = x3.reshape(tbt * S, D)

    # u = tanh(x @ W_u^T + b_u)  -> (TBT*S, Ap), f32 accumulation on the MXU.
    u = jnp.tanh(
        jnp.dot(x2, wu_ref[...], preferred_element_type=jnp.float32) + bu_ref[...]
    )
    u3 = u.reshape(tbt, S, -1)                        # (TBT, S, Ap)

    # Attention logits: VPU multiply + lane reduce (zero-padded A lanes add 0).
    v = jnp.sum(u3 * wv_ref[...], axis=-1, keepdims=True)        # (TBT, S, 1)

    # Per-group softmax over S (axis 1), numerically stable, f32.
    m = jnp.max(v, axis=1, keepdims=True)                         # (TBT, 1, 1)
    e = jnp.exp(v - m)                                            # (TBT, S, 1)
    denom = jnp.sum(e, axis=1, keepdims=True)                     # (TBT, 1, 1)
    alpha = e * pl.reciprocal(denom, approx=True)                 # (TBT, S, 1)

    # out[g, :] = sum_s alpha[g, s] * x[g, s, :]                  -> (TBT, D)
    out = jnp.sum(alpha * x3.astype(jnp.float32), axis=1)
    o_ref[...] = out.astype(o_ref.dtype)


def sum_attention(x, wu, bu, wv, *, block_rows=None):
    """Pallas implementation of SumAttention.forward.

    x  : (B, T, S, D) float32 or bfloat16 (used as given; never copied/cast/padded
         in the wrapper — the op is HBM-bandwidth bound)
    wu : (A, D)  linear_u.weight
    bu : (A,)    linear_u.bias
    wv : (1, A)  linear_v.weight (no bias)
    returns (B, T, D) in x.dtype.
    """
    B, T, S, D = x.shape
    A = wu.shape[0]

    if T == 1:
        # Mirror the PyTorch quirk: `inputs.squeeze()` removes ALL unit dims, so
        # the returned rank depends on B/S as well.
        return jnp.squeeze(x)

    G = B * T
    x_bytes = jnp.dtype(x.dtype).itemsize

    capacity = _vmem_capacity_bytes()
    budget = min(capacity // 3, 48 << 20)
    per_row = _per_row_vmem_bytes(S, D, A, x_bytes)
    tbt = _choose_block_rows(G, per_row, budget, force=block_rows)
    grid = pl.cdiv(G, tbt)

    # Lane-pad A to a multiple of 128 with zero columns (tanh(0)*0 contributes
    # nothing) so the u / logits path uses full vregs.  Weights are tiny.
    Ap = _round_up(A, 128)
    wu_t = jnp.pad(wu.T.astype(x.dtype), ((0, 0), (0, Ap - A)))          # (D, Ap)
    bu_p = jnp.pad(bu.astype(jnp.float32), (0, Ap - A)).reshape(1, Ap)   # (1, Ap)
    wv_p = jnp.pad(wv.reshape(-1).astype(jnp.float32), (0, Ap - A)).reshape(1, Ap)

    # No wrapper-side jnp.pad of x: the last grid block may be partial; its
    # out-of-range output rows are masked on writeback and every row is
    # independent, so garbage tail rows never contaminate valid output.
    x_flat = x.reshape(G, S, D)

    Dl = _round_up(D, 128)
    est = tbt * per_row + 2 * (Dl * Ap * x_bytes + 2 * Ap * 4)
    vmem_limit = int(min(capacity * 3 // 4, max(32 << 20, int(est * 1.5) + (2 << 20))))

    cost = pl.CostEstimate(
        flops=2 * G * S * D * A + 4 * G * S * (A + D),
        transcendentals=G * S * (A + 1),
        bytes_accessed=G * S * D * x_bytes + G * D * x_bytes + (A * D + 2 * A) * 4,
    )

    out = pl.pallas_call(
        _sum_attention_kernel,
        out_shape=jax.ShapeDtypeStruct((G, D), x.dtype),
        grid_spec=pltpu.PrefetchScalarGridSpec(
            num_scalar_prefetch=0,
            grid=(grid,),
            in_specs=[
                pl.BlockSpec((tbt, S, D), lambda i: (i, 0, 0)),
                pl.BlockSpec((D, Ap), lambda i: (0, 0)),
                pl.BlockSpec((1, Ap), lambda i: (0, 0)),
                pl.BlockSpec((1, Ap), lambda i: (0, 0)),
            ],
            out_specs=pl.BlockSpec((tbt, D), lambda i: (i, 0)),
        ),
        compiler_params=pltpu.CompilerParams(
            dimension_semantics=("parallel",),   # independent groups -> megacore-shardable
            vmem_limit_bytes=vmem_limit,
        ),
        cost_estimate=cost,
    )(x_flat, wu_t, bu_p, wv_p)

    # TODO(synk): if production D << 128, the x / output lane dim is mostly padding
    # (DMA + VMEM waste); a lane-dense repack (batching several feature groups into
    # the last dim) would be needed to reach full HBM bandwidth for that regime.
    return out.reshape(B, T, D)


def sum_attention_reference(x, wu, bu, wv):
    """Pure-JAX reference mirroring the PyTorch forward (computed in f32)."""
    if x.shape[1] == 1:
        return jnp.squeeze(x)
    xf = x.astype(jnp.float32)
    u = jnp.tanh(jnp.einsum("btsd,ad->btsa", xf, wu.astype(jnp.float32)) + bu)
    v = jnp.einsum("btsa,oa->btso", u, wv.astype(jnp.float32))
    alpha = jax.nn.softmax(v, axis=2)                       # softmax over S
    alpha = jnp.swapaxes(alpha, 2, 3)                       # (B,T,1,S)
    out = jnp.matmul(alpha, xf)                             # (B,T,1,D)
    return jnp.squeeze(out, axis=2)                         # (B,T,D) f32


if __name__ == "__main__":
    def make_inputs(key, B, T, S, D, A, dtype=jnp.float32):
        kx, kwu, kbu, kwv = jax.random.split(key, 4)
        x = jax.random.normal(kx, (B, T, S, D), dtype=jnp.float32).astype(dtype)
        wu = jax.random.normal(kwu, (A, D), dtype=jnp.float32) * (1.0 / jnp.sqrt(D))
        bu = jax.random.normal(kbu, (A,), dtype=jnp.float32) * 0.1
        wv = jax.random.normal(kwv, (1, A), dtype=jnp.float32) * (1.0 / jnp.sqrt(A))
        return x, wu, bu, wv

    key = jax.random.PRNGKey(0)

    # Test 1: f32, G = B*T = 8 -> single full-extent block.
    B, T, S, D, A = 2, 4, 16, 32, 16
    x, wu, bu, wv = make_inputs(key, B, T, S, D, A)
    out = jax.block_until_ready(sum_attention(x, wu, bu, wv))
    ref = sum_attention_reference(x, wu, bu, wv)
    assert out.shape == (B, T, D), out.shape
    # approx=True reciprocal -> slightly relaxed tolerance vs exact f32 softmax.
    assert jnp.allclose(out, ref, atol=5e-3, rtol=5e-3), float(jnp.max(jnp.abs(out - ref)))

    # Test 2: G = 15 (not a multiple of 8) -> single full-extent (15, D) block.
    B2, T2, S2, D2, A2 = 3, 5, 8, 32, 16
    x2, wu2, bu2, wv2 = make_inputs(jax.random.PRNGKey(1), B2, T2, S2, D2, A2)
    out2 = jax.block_until_ready(sum_attention(x2, wu2, bu2, wv2))
    ref2 = sum_attention_reference(x2, wu2, bu2, wv2)
    assert out2.shape == (B2, T2, D2), out2.shape
    assert jnp.allclose(out2, ref2, atol=5e-3, rtol=5e-3), float(jnp.max(jnp.abs(out2 - ref2)))

    # Test 3: force block_rows=8 on G=15 -> 2 grid steps with a masked partial
    # tail block and NO wrapper-side padding of x.
    out3 = jax.block_until_ready(sum_attention(x2, wu2, bu2, wv2, block_rows=8))
    assert out3.shape == (B2, T2, D2), out3.shape
    assert jnp.allclose(out3, ref2, atol=5e-3, rtol=5e-3), float(jnp.max(jnp.abs(out3 - ref2)))

    # Test 4: x already arrives as bf16 (no wrapper-side cast of a f32 operand).
    xb = x.astype(jnp.bfloat16)
    outb = jax.block_until_ready(sum_attention(xb, wu, bu, wv))
    refb = sum_attention_reference(xb, wu, bu, wv)
    assert outb.shape == (B, T, D), outb.shape
    assert jnp.allclose(outb.astype(jnp.float32), refb, atol=1e-1, rtol=1e-1), \
        float(jnp.max(jnp.abs(outb.astype(jnp.float32) - refb)))

    print("KERNEL_OK")
</pallas_src>

<mosaic_0001>
module attributes {stable_mosaic.version = 11 : i64} {
  func.func @_sum_attention_kernel(%arg0: i32, %arg1: memref<8x16x32xf32, #tpu.memory_space<vmem>>, %arg2: memref<32x128xf32, #tpu.memory_space<vmem>>, %arg3: memref<1x128xf32, #tpu.memory_space<vmem>>, %arg4: memref<1x128xf32, #tpu.memory_space<vmem>>, %arg5: memref<8x32xf32, #tpu.memory_space<vmem>>) attributes {dimension_semantics = [#tpu.dimension_semantics<parallel>], iteration_bounds = array<i64: 1>, scalar_prefetch = 0 : i64, scratch_operands = 0 : i64, tpu.core_type = #tpu.core_type<tc>, window_params = [{transform_indices = @transform_0, window_bounds = array<i64: 8, 16, 32>}, {pipeline_mode = #tpu.pipeline_mode<synchronous>, transform_indices = @transform_1, window_bounds = array<i64: 32, 128>}, {pipeline_mode = #tpu.pipeline_mode<synchronous>, transform_indices = @transform_2, window_bounds = array<i64: 1, 128>}, {pipeline_mode = #tpu.pipeline_mode<synchronous>, transform_indices = @transform_3, window_bounds = array<i64: 1, 128>}, {transform_indices = @transform_4, window_bounds = array<i64: 8, 32>}]} {
    %c0 = arith.constant 0 : index
    %c0_0 = arith.constant 0 : index
    %c0_1 = arith.constant 0 : index
    %0 = vector.load %arg1[%c0, %c0_0, %c0_1] : memref<8x16x32xf32, #tpu.memory_space<vmem>>, vector<8x16x32xf32>
    %1 = vector.shape_cast %0 : vector<8x16x32xf32> to vector<128x32xf32>
    %c0_2 = arith.constant 0 : index
    %c0_3 = arith.constant 0 : index
    %2 = vector.load %arg2[%c0_2, %c0_3] : memref<32x128xf32, #tpu.memory_space<vmem>>, vector<32x128xf32>
    %cst = arith.constant dense<0.000000e+00> : vector<128x128xf32>
    %3 = tpu.matmul %1, %2, %cst {dimension_numbers = #tpu.dot_dimension_numbers<[1], [0], [0], [1], [0, 0, 1, 1], [], []>} : vector<128x32xf32>, vector<32x128xf32>, vector<128x128xf32> -> vector<128x128xf32>
    %c0_4 = arith.constant 0 : index
    %c0_5 = arith.constant 0 : index
    %4 = vector.load %arg3[%c0_4, %c0_5] : memref<1x128xf32, #tpu.memory_space<vmem>>, vector<1x128xf32>
    %5 = vector.broadcast %4 : vector<1x128xf32> to vector<128x128xf32>
    %6 = arith.addf %3, %5 : vector<128x128xf32>
    %7 = math.tanh %6 : vector<128x128xf32>
    %8 = vector.shape_cast %7 : vector<128x128xf32> to vector<8x16x128xf32>
    %c0_6 = arith.constant 0 : index
    %c0_7 = arith.constant 0 : index
    %9 = vector.load %arg4[%c0_6, %c0_7] : memref<1x128xf32, #tpu.memory_space<vmem>>, vector<1x128xf32>
    %10 = vector.shape_cast %9 : vector<1x128xf32> to vector<1x1x128xf32>
    %11 = vector.broadcast %10 : vector<1x1x128xf32> to vector<8x16x128xf32>
    %12 = arith.mulf %8, %11 : vector<8x16x128xf32>
    %cst_8 = arith.constant dense<0.000000e+00> : vector<8x16xf32>
    %13 = vector.multi_reduction <add>, %12, %cst_8 [2] : vector<8x16x128xf32> to vector<8x16xf32>
    %14 = vector.shape_cast %13 : vector<8x16xf32> to vector<8x16x1xf32>
    %cst_9 = arith.constant dense<0xFF800000> : vector<8x1xf32>
    %15 = vector.multi_reduction <maximumf>, %14, %cst_9 [1] : vector<8x16x1xf32> to vector<8x1xf32>
    %16 = vector.shape_cast %15 : vector<8x1xf32> to vector<8x1x1xf32>
    %17 = vector.broadcast %16 : vector<8x1x1xf32> to vector<8x16x1xf32>
    %18 = arith.subf %14, %17 : vector<8x16x1xf32>
    %19 = math.exp %18 : vector<8x16x1xf32>
    %cst_10 = arith.constant dense<0.000000e+00> : vector<8x1xf32>
    %20 = vector.multi_reduction <add>, %19, %cst_10 [1] : vector<8x16x1xf32> to vector<8x1xf32>
    %21 = vector.shape_cast %20 : vector<8x1xf32> to vector<8x1x1xf32>
    %22 = tpu.reciprocal %21 {approx = true} : vector<8x1x1xf32> -> vector<8x1x1xf32>
    %23 = vector.broadcast %22 : vector<8x1x1xf32> to vector<8x16x1xf32>
    %24 = arith.mulf %19, %23 : vector<8x16x1xf32>
    %25 = vector.broadcast %24 : vector<8x16x1xf32> to vector<8x16x32xf32>
    %26 = arith.mulf %25, %0 : vector<8x16x32xf32>
    %cst_11 = arith.constant dense<0.000000e+00> : vector<8x32xf32>
    %27 = vector.multi_reduction <add>, %26, %cst_11 [1] : vector<8x16x32xf32> to vector<8x32xf32>
    %c0_12 = arith.constant 0 : index
    %c0_13 = arith.constant 0 : index
    %28 = vector.load %arg5[%c0_12, %c0_13] : memref<8x32xf32, #tpu.memory_space<vmem>>, vector<8x32xf32>
    tpu.vector_store %arg5[%c0_12, %c0_13], %27 {strides = array<i32>} : memref<8x32xf32, #tpu.memory_space<vmem>>, vector<8x32xf32>,
    return
  }
  func.func @transform_0(%arg0: i32) -> (i32, i32, i32) {
    %c0_i32 = arith.constant 0 : i32
    %c0_i32_0 = arith.constant 0 : i32
    %c0_i32_1 = arith.constant 0 : i32
    return %arg0, %c0_i32, %c0_i32_0 : i32, i32, i32
  }
  func.func @transform_1(%arg0: i32) -> (i32, i32) {
    %c0_i32 = arith.constant 0 : i32
    %c0_i32_0 = arith.constant 0 : i32
    %c0_i32_1 = arith.constant 0 : i32
    return %c0_i32, %c0_i32_0 : i32, i32
  }
  func.func @transform_2(%arg0: i32) -> (i32, i32) {
    %c0_i32 = arith.constant 0 : i32
    %c0_i32_0 = arith.constant 0 : i32
    %c0_i32_1 = arith.constant 0 : i32
    return %c0_i32, %c0_i32_0 : i32, i32
  }
  func.func @transform_3(%arg0: i32) -> (i32, i32) {
    %c0_i32 = arith.constant 0 : i32
    %c0_i32_0 = arith.constant 0 : i32
    %c0_i32_1 = arith.constant 0 : i32
    return %c0_i32, %c0_i32_0 : i32, i32
  }
  func.func @transform_4(%arg0: i32) -> (i32, i32) {
    %c0_i32 = arith.constant 0 : i32
    %c0_i32_0 = arith.constant 0 : i32
    return %arg0, %c0_i32 : i32, i32
  }
}

</mosaic_0001>

<llo_original>
// kernel: tpu_custom_call.1
$region0: #{tpu_custom_call.1}
  #allocation0 [shape = 'u32[]', space=smem, size = 0x4, offset = 0x4, fixed_abs, tag = 'smem constant byte address 0x4 - core index']
  #allocation1 [shape = 'u32[72,128]{1,0:T(1,128)}', space=vmem, size = 0x9000, scoped, tag = 'internal scratch']
  %s0 = inlined_call_operand.hbm [shape: f32[8,16,32], index: 0, kind: input, shape index: {}]
  %s1 = inlined_call_operand.hbm [shape: f32[32,128], index: 1, kind: input, shape index: {}]
  %s2 = inlined_call_operand.vmem [shape: f32[1,128], index: 2, kind: input, shape index: {}]
  %s3 = inlined_call_operand.vmem [shape: f32[1,128], index: 3, kind: input, shape index: {}]
  %s4 = inlined_call_operand.hbm [shape: f32[8,32], index: 4, kind: output, shape index: {}]
  %s5 = sld [smem:[#allocation0]]
  $region34: #{tpu_custom_call.1} parent=0
    _
  %s7 = ssub.s32 1, %s5
  %s8 = scalar_select 0, %s7, %s5
  $region1: #{tpu_custom_call.1} parent=0
    #allocation2 [shape = 'u8[65536]{0}', space=vmem, size = 0x10000, scoped, tag = 'input window, operand 0, single buffered']
    #allocation3 [shape = 's32[1]{0}', space=sflag, size = 0x4, scoped, tag = 'scoped memory for tpu_custom_call.1']
    #allocation4 [shape = 's32[1]{0}', space=sflag, size = 0x4, scoped, tag = 'scoped memory for tpu_custom_call.1']
    #allocation5 [shape = 'u8[16384]{0}', space=vmem, size = 0x4000, scoped, tag = 'input window, operand 1, single buffered']
    #allocation6 [shape = 's32[1]{0}', space=sflag, size = 0x4, scoped, tag = 'scoped memory for tpu_custom_call.1']
    #allocation7 [shape = 'u8[4096]{0}', space=vmem, size = 0x1000, scoped, tag = 'output window, operand 0, single buffered']
    %9 = vsyncpa [#allocation3], 0
    %10 = vsyncpa [#allocation6], 0
    %11 = vsyncpa [#allocation4], 0
    // Predicated region
    $region2: #{tpu_custom_call.1} parent=1 // pred_check
      _
    $region3: #{tpu_custom_call.1} parent=1 // pred_check_branch
      %13 = sbr.rel (0) target = $region5
    $region4: #{tpu_custom_call.1} parent=1 // pred_region
      %15 = vsyncadd [#allocation3], 0
      %s16 = sshll.u32 %s0, 4
      %s17 = int_to_ptr.hbm [resolvable:$true] %s16
      %s18 = sshll.u32 [#allocation2], 4
      %s19 = int_to_ptr.vmem [resolvable:$true] %s18
      %24 = dma.hbm_to_vmem [thread:$0]  %s17, 2048, %s19, [#allocation3], 128, 128, 8
    $region5: #{tpu_custom_call.1} parent=1 // pred_fallthru
      _
    // Predicated region
    $region6: #{tpu_custom_call.1} parent=1 // pred_check
      _
    $region7: #{tpu_custom_call.1} parent=1 // pred_check_branch
      %26 = sbr.rel (0) target = $region9
    $region8: #{tpu_custom_call.1} parent=1 // pred_region
      %28 = vsyncadd [#allocation6], 0
      %s29 = sshll.u32 %s1, 4
      %s30 = int_to_ptr.hbm [resolvable:$true] %s29
      %s31 = sshll.u32 [#allocation5], 4
      %s32 = int_to_ptr.vmem [resolvable:$true] %s31
      %37 = dma.hbm_to_vmem [thread:$0]  %s30, 512, %s32, [#allocation6], 128, 128, 8
    $region9: #{tpu_custom_call.1} parent=1 // pred_fallthru
      _
    // Predicated region
    $region10: #{tpu_custom_call.1} parent=1 // pred_check
      _
    $region11: #{tpu_custom_call.1} parent=1 // pred_check_branch
      %39 = sbr.rel (0) target = $region13
    $region12: #{tpu_custom_call.1} parent=1 // pred_region
      _
    $region13: #{tpu_custom_call.1} parent=1 // pred_fallthru
      _
    // Predicated region
    $region14: #{tpu_custom_call.1} parent=1 // pred_check
      _
    $region15: #{tpu_custom_call.1} parent=1 // pred_check_branch
      %41 = sbr.rel (0) target = $region17
    $region16: #{tpu_custom_call.1} parent=1 // pred_region
      _
    $region17: #{tpu_custom_call.1} parent=1 // pred_fallthru
      _
    // Predicated region
    $region18: #{tpu_custom_call.1} parent=1 // pred_check
      _
    $region19: #{tpu_custom_call.1} parent=1 // pred_check_branch
      %43 = sbr.rel (0) target = $region21
    $region20: #{tpu_custom_call.1} parent=1 // pred_region
      %45 = dma.done [#allocation3], 2048
    $region21: #{tpu_custom_call.1} parent=1 // pred_fallthru
      _
    // Predicated region
    $region22: #{tpu_custom_call.1} parent=1 // pred_check
      _
    $region23: #{tpu_custom_call.1} parent=1 // pred_check_branch
      %47 = sbr.rel (0) target = $region25
    $region24: #{tpu_custom_call.1} parent=1 // pred_region
      %49 = dma.done [#allocation6], 512
    $region25: #{tpu_custom_call.1} parent=1 // pred_fallthru
      _
    %v50 = vld [vmem:[#allocation2] sm:$0xff]
    %v51 = vld [vmem:[#allocation2 + $0x8] sm:$0xff]
    %v52 = vld [vmem:[#allocation2 + $0x10] sm:$0xff]
    %v53 = vld [vmem:[#allocation2 + $0x18] sm:$0xff]
    %v54 = vld [vmem:[#allocation2 + $0x20] sm:$0xff]
    %v55 = vld [vmem:[#allocation2 + $0x28] sm:$0xff]
    %v56 = vld [vmem:[#allocation2 + $0x30] sm:$0xff]
    %v57 = vld [vmem:[#allocation2 + $0x38] sm:$0xff]
    %v58 = vld [vmem:[#allocation2 + $0x40] sm:$0xff]
    %v59 = vld [vmem:[#allocation2 + $0x48] sm:$0xff]
    %v60 = vld [vmem:[#allocation2 + $0x50] sm:$0xff]
    %v61 = vld [vmem:[#allocation2 + $0x58] sm:$0xff]
    %v62 = vld [vmem:[#allocation2 + $0x60] sm:$0xff]
    %v63 = vld [vmem:[#allocation2 + $0x68] sm:$0xff]
    %v64 = vld [vmem:[#allocation2 + $0x70] sm:$0xff]
    %v65 = vld [vmem:[#allocation2 + $0x78] sm:$0xff]
    %v66 = vld [vmem:[#allocation5] sm:$0xff]
    %v67 = vld [vmem:[#allocation5 + $0x8] sm:$0xff]
    %v68 = vld [vmem:[#allocation5 + $0x10] sm:$0xff]
    %v69 = vld [vmem:[#allocation5 + $0x18] sm:$0xff]
    %v70 = vld [vmem:[%s2] sm:$0x1]
    %v72 = vperm.slane %v70, 0
    %vm74 = vcmask 261120
    %v76 = vsel %vm74, %v50, 0
    %v79 = vsel %vm74, %v51, 0
    %v82 = vsel %vm74, %v52, 0
    %v85 = vsel %vm74, %v53, 0
    %v88 = vsel %vm74, %v54, 0
    %v91 = vsel %vm74, %v55, 0
    %v94 = vsel %vm74, %v56, 0
    %v97 = vsel %vm74, %v57, 0
    %v100 = vsel %vm74, %v58, 0
    %v103 = vsel %vm74, %v59, 0
    %v106 = vsel %vm74, %v60, 0
    %v109 = vsel %vm74, %v61, 0
    %v112 = vsel %vm74, %v62, 0
    %v115 = vsel %vm74, %v63, 0
    %v118 = vsel %vm74, %v64, 0
    %v121 = vsel %vm74, %v65, 0
    %123 = vmatpush.msra.mxu0 0.0
    %124 = vmatpush.msra.mxu0 0.0
    %125 = vmatpush.msra.mxu0 0.0
    %126 = vmatpush.msra.mxu0 0.0
    %127 = vmatpush.msra.mxu0 0.0
    %128 = vmatpush.msra.mxu0 0.0
    %129 = vmatpush.msra.mxu0 0.0
    %130 = vmatpush.msra.mxu0 0.0
    %131 = vmatpush.msra.mxu0 0.0
    %132 = vmatpush.msra.mxu0 0.0
    %133 = vmatpush.msra.mxu0 0.0
    %134 = vmatpush.msra.mxu0 0.0
    %135 = vmatpush.msra.mxu0 %v69
    %136 = vmatpush.msra.mxu0 %v68
    %137 = vmatpush.msra.mxu0 %v67
    %138 = vmatpush.msra.mxu0 %v66
    %139 = vmatmul.f32.gmra.mxu0 %v76
    %v140 = vpop.f32.mrf.mxu0
    %v141 = vadd.f32 %v72, %v140
    %142 = vmatmul.f32.gmra.mxu0 %v79
    %v143 = vpop.f32.mrf.mxu0
    %v144 = vadd.f32 %v72, %v143
    %145 = vmatmul.f32.gmra.mxu0 %v82
    %v146 = vpop.f32.mrf.mxu0
    %v147 = vadd.f32 %v72, %v146
    %148 = vmatmul.f32.gmra.mxu0 %v85
    %v149 = vpop.f32.mrf.mxu0
    %v150 = vadd.f32 %v72, %v149
    %151 = vmatmul.f32.gmra.mxu0 %v88
    %v152 = vpop.f32.mrf.mxu0
    %v153 = vadd.f32 %v72, %v152
    %154 = vmatmul.f32.gmra.mxu0 %v91
    %v155 = vpop.f32.mrf.mxu0
    %v156 = vadd.f32 %v72, %v155
    %157 = vmatmul.f32.gmra.mxu0 %v94
    %v158 = vpop.f32.mrf.mxu0
    %v159 = vadd.f32 %v72, %v158
    %160 = vmatmul.f32.gmra.mxu0 %v97
    %v161 = vpop.f32.mrf.mxu0
    %v162 = vadd.f32 %v72, %v161
    %163 = vmatmul.f32.gmra.mxu0 %v100
    %v164 = vpop.f32.mrf.mxu0
    %v165 = vadd.f32 %v72, %v164
    %166 = vmatmul.f32.gmra.mxu0 %v103
    %v167 = vpop.f32.mrf.mxu0
    %v168 = vadd.f32 %v72, %v167
    %169 = vmatmul.f32.gmra.mxu0 %v106
    %v170 = vpop.f32.mrf.mxu0
    %v171 = vadd.f32 %v72, %v170
    %172 = vmatmul.f32.gmra.mxu0 %v109
    %v173 = vpop.f32.mrf.mxu0
    %v174 = vadd.f32 %v72, %v173
    %175 = vmatmul.f32.gmra.mxu0 %v112
    %v176 = vpop.f32.mrf.mxu0
    %v177 = vadd.f32 %v72, %v176
    %178 = vmatmul.f32.gmra.mxu0 %v115
    %v179 = vpop.f32.mrf.mxu0
    %v180 = vadd.f32 %v72, %v179
    %181 = vmatmul.f32.gmra.mxu0 %v118
    %v182 = vpop.f32.mrf.mxu0
    %v183 = vadd.f32 %v72, %v182
    %184 = vmatmul.f32.gmra.mxu0 %v121
    %v185 = vpop.f32.mrf.mxu0
    %v186 = vadd.f32 %v72, %v185
    %187 = vdwg.mxu0
    %v188 = vtanh.pop %v141
    %v189 = vtanh.pop %v144
    %v190 = vtanh.pop %v147
    %v191 = vtanh.pop %v150
    %v192 = vtanh.pop %v153
    %v193 = vtanh.pop %v156
    %v194 = vtanh.pop %v159
    %v195 = vtanh.pop %v162
    %v196 = vtanh.pop %v165
    %v197 = vtanh.pop %v168
    %v198 = vtanh.pop %v171
    %v199 = vtanh.pop %v174
    %v200 = vtanh.pop %v177
    %v201 = vtanh.pop %v180
    %v202 = vtanh.pop %v183
    %v203 = vtanh.pop %v186
    %v204 = vld [vmem:[%s3] sm:$0x1]
    %v206 = vperm.slane %v204, 0
    %v208 = vmul.f32 %v188, %v206
    %v209 = vmul.f32 %v189, %v206
    %v210 = vmul.f32 %v190, %v206
    %v211 = vmul.f32 %v191, %v206
    %v212 = vmul.f32 %v192, %v206
    %v213 = vmul.f32 %v193, %v206
    %v214 = vmul.f32 %v194, %v206
    %v215 = vmul.f32 %v195, %v206
    %v216 = vmul.f32 %v196, %v206
    %v217 = vmul.f32 %v197, %v206
    %v218 = vmul.f32 %v198, %v206
    %v219 = vmul.f32 %v199, %v206
    %v220 = vmul.f32 %v200, %v206
    %v221 = vmul.f32 %v201, %v206
    %v222 = vmul.f32 %v202, %v206
    %v223 = vmul.f32 %v203, %v206
    %224 = vadd.xlane.f32.xlu0 %v208
    %v225 = vpop.xlane.xlu0 %224
    %226 = vadd.xlane.f32.xlu0 %v209
    %v227 = vpop.xlane.xlu0 %226
    %228 = vadd.xlane.f32.xlu0 %v210
    %v229 = vpop.xlane.xlu0 %228
    %230 = vadd.xlane.f32.xlu0 %v211
    %v231 = vpop.xlane.xlu0 %230
    %232 = vadd.xlane.f32.xlu0 %v212
    %v233 = vpop.xlane.xlu0 %232
    %234 = vadd.xlane.f32.xlu0 %v213
    %v235 = vpop.xlane.xlu0 %234
    %236 = vadd.xlane.f32.xlu0 %v214
    %v237 = vpop.xlane.xlu0 %236
    %238 = vadd.xlane.f32.xlu0 %v215
    %v239 = vpop.xlane.xlu0 %238
    %240 = vadd.xlane.f32.xlu0 %v216
    %v241 = vpop.xlane.xlu0 %240
    %242 = vadd.xlane.f32.xlu0 %v217
    %v243 = vpop.xlane.xlu0 %242
    %244 = vadd.xlane.f32.xlu0 %v218
    %v245 = vpop.xlane.xlu0 %244
    %246 = vadd.xlane.f32.xlu0 %v219
    %v247 = vpop.xlane.xlu0 %246
    %248 = vadd.xlane.f32.xlu0 %v220
    %v249 = vpop.xlane.xlu0 %248
    %250 = vadd.xlane.f32.xlu0 %v221
    %v251 = vpop.xlane.xlu0 %250
    %252 = vadd.xlane.f32.xlu0 %v222
    %v253 = vpop.xlane.xlu0 %252
    %254 = vadd.xlane.f32.xlu0 %v223
    %v255 = vpop.xlane.xlu0 %254
    %v256 = vmax.f32 %v225, %v227
    %v257 = vrot.slane %v256, 4
    %v258 = vmax.f32 %v256, %v257
    %v259 = vrot.slane %v258, 2
    %v260 = vmax.f32 %v258, %v259
    %v261 = vrot.slane %v260, 1
    %v262 = vmax.f32 %v260, %v261
    %v263 = vmax.f32 %v229, %v231
    %v264 = vrot.slane %v263, 4
    %v265 = vmax.f32 %v263, %v264
    %v266 = vrot.slane %v265, 2
    %v267 = vmax.f32 %v265, %v266
    %v268 = vrot.slane %v267, 1
    %v269 = vmax.f32 %v267, %v268
    %v270 = vmax.f32 %v233, %v235
    %v271 = vrot.slane %v270, 4
    %v272 = vmax.f32 %v270, %v271
    %v273 = vrot.slane %v272, 2
    %v274 = vmax.f32 %v272, %v273
    %v275 = vrot.slane %v274, 1
    %v276 = vmax.f32 %v274, %v275
    %v277 = vmax.f32 %v237, %v239
    %v278 = vrot.slane %v277, 4
    %v279 = vmax.f32 %v277, %v278
    %v280 = vrot.slane %v279, 2
    %v281 = vmax.f32 %v279, %v280
    %v282 = vrot.slane %v281, 1
    %v283 = vmax.f32 %v281, %v282
    %v284 = vmax.f32 %v241, %v243
    %v285 = vrot.slane %v284, 4
    %v286 = vmax.f32 %v284, %v285
    %v287 = vrot.slane %v286, 2
    %v288 = vmax.f32 %v286, %v287
    %v289 = vrot.slane %v288, 1
    %v290 = vmax.f32 %v288, %v289
    %v291 = vmax.f32 %v245, %v247
    %v292 = vrot.slane %v291, 4
    %v293 = vmax.f32 %v291, %v292
    %v294 = vrot.slane %v293, 2
    %v295 = vmax.f32 %v293, %v294
    %v296 = vrot.slane %v295, 1
    %v297 = vmax.f32 %v295, %v296
    %v298 = vmax.f32 %v249, %v251
    %v299 = vrot.slane %v298, 4
    %v300 = vmax.f32 %v298, %v299
    %v301 = vrot.slane %v300, 2
    %v302 = vmax.f32 %v300, %v301
    %v303 = vrot.slane %v302, 1
    %v304 = vmax.f32 %v302, %v303
    %v305 = vmax.f32 %v253, %v255
    %v306 = vrot.slane %v305, 4
    %v307 = vmax.f32 %v305, %v306
    %v308 = vrot.slane %v307, 2
    %v309 = vmax.f32 %v307, %v308
    %v310 = vrot.slane %v309, 1
    %v311 = vmax.f32 %v309, %v310
    %v312 = vsub.f32 %v225, %v262
    %v313 = vsub.f32 %v227, %v262
    %v314 = vsub.f32 %v229, %v269
    %v315 = vsub.f32 %v231, %v269
    %v316 = vsub.f32 %v233, %v276
    %v317 = vsub.f32 %v235, %v276
    %v318 = vsub.f32 %v237, %v283
    %v319 = vsub.f32 %v239, %v283
    %v320 = vsub.f32 %v241, %v290
    %v321 = vsub.f32 %v243, %v290
    %v322 = vsub.f32 %v245, %v297
    %v323 = vsub.f32 %v247, %v297
    %v324 = vsub.f32 %v249, %v304
    %v325 = vsub.f32 %v251, %v304
    %v326 = vsub.f32 %v253, %v311
    %v327 = vsub.f32 %v255, %v311
    %v328 = vmul.f32 %v312, 1.442695
    %v329 = vpow.pop %v328
    %v330 = vmul.f32 %v313, 1.442695
    %v331 = vpow.pop %v330
    %v332 = vmul.f32 %v314, 1.442695
    %v333 = vpow.pop %v332
    %v334 = vmul.f32 %v315, 1.442695
    %v335 = vpow.pop %v334
    %v336 = vmul.f32 %v316, 1.442695
    %v337 = vpow.pop %v336
    %v338 = vmul.f32 %v317, 1.442695
    %v339 = vpow.pop %v338
    %v340 = vmul.f32 %v318, 1.442695
    %v341 = vpow.pop %v340
    %v342 = vmul.f32 %v319, 1.442695
    %v343 = vpow.pop %v342
    %v344 = vmul.f32 %v320, 1.442695
    %v345 = vpow.pop %v344
    %v346 = vmul.f32 %v321, 1.442695
    %v347 = vpow.pop %v346
    %v348 = vmul.f32 %v322, 1.442695
    %v349 = vpow.pop %v348
    %v350 = vmul.f32 %v323, 1.442695
    %v351 = vpow.pop %v350
    %v352 = vmul.f32 %v324, 1.442695
    %v353 = vpow.pop %v352
    %v354 = vmul.f32 %v325, 1.442695
    %v355 = vpow.pop %v354
    %v356 = vmul.f32 %v326, 1.442695
    %v357 = vpow.pop %v356
    %v358 = vmul.f32 %v327, 1.442695
    %v359 = vpow.pop %v358
    %v360 = vadd.f32 %v329, %v331
    %v361 = vrot.slane %v360, 4
    %v362 = vadd.f32 %v360, %v361
    %v363 = vrot.slane %v362, 2
    %v364 = vadd.f32 %v362, %v363
    %v365 = vrot.slane %v364, 1
    %v366 = vadd.f32 %v364, %v365
    %v367 = vadd.f32 %v333, %v335
    %v368 = vrot.slane %v367, 4
    %v369 = vadd.f32 %v367, %v368
    %v370 = vrot.slane %v369, 2
    %v371 = vadd.f32 %v369, %v370
    %v372 = vrot.slane %v371, 1
    %v373 = vadd.f32 %v371, %v372
    %v374 = vadd.f32 %v337, %v339
    %v375 = vrot.slane %v374, 4
    %v376 = vadd.f32 %v374, %v375
    %v377 = vrot.slane %v376, 2
    %v378 = vadd.f32 %v376, %v377
    %v379 = vrot.slane %v378, 1
    %v380 = vadd.f32 %v378, %v379
    %v381 = vadd.f32 %v341, %v343
    %v382 = vrot.slane %v381, 4
    %v383 = vadd.f32 %v381, %v382
    %v384 = vrot.slane %v383, 2
    %v385 = vadd.f32 %v383, %v384
    %v386 = vrot.slane %v385, 1
    %v387 = vadd.f32 %v385, %v386
    %v388 = vadd.f32 %v345, %v347
    %v389 = vrot.slane %v388, 4
    %v390 = vadd.f32 %v388, %v389
    %v391 = vrot.slane %v390, 2
    %v392 = vadd.f32 %v390, %v391
    %v393 = vrot.slane %v392, 1
    %v394 = vadd.f32 %v392, %v393
    %v395 = vadd.f32 %v349, %v351
    %v396 = vrot.slane %v395, 4
    %v397 = vadd.f32 %v395, %v396
    %v398 = vrot.slane %v397, 2
    %v399 = vadd.f32 %v397, %v398
    %v400 = vrot.slane %v399, 1
    %v401 = vadd.f32 %v399, %v400
    %v402 = vadd.f32 %v353, %v355
    %v403 = vrot.slane %v402, 4
    %v404 = vadd.f32 %v402, %v403
    %v405 = vrot.slane %v404, 2
    %v406 = vadd.f32 %v404, %v405
    %v407 = vrot.slane %v406, 1
    %v408 = vadd.f32 %v406, %v407
    %v409 = vadd.f32 %v357, %v359
    %v410 = vrot.slane %v409, 4
    %v411 = vadd.f32 %v409, %v410
    %v412 = vrot.slane %v411, 2
    %v413 = vadd.f32 %v411, %v412
    %v414 = vrot.slane %v413, 1
    %v415 = vadd.f32 %v413, %v414
    %v416 = vrcp.pop %v366
    %v417 = vrcp.pop %v373
    %v418 = vrcp.pop %v380
    %v419 = vrcp.pop %v387
    %v420 = vrcp.pop %v394
    %v421 = vrcp.pop %v401
    %v422 = vrcp.pop %v408
    %v423 = vrcp.pop %v415
    %v424 = vmul.f32 %v329, %v416
    %v425 = vmul.f32 %v331, %v416
    %v426 = vmul.f32 %v333, %v417
    %v427 = vmul.f32 %v335, %v417
    %v428 = vmul.f32 %v337, %v418
    %v429 = vmul.f32 %v339, %v418
    %v430 = vmul.f32 %v341, %v419
    %v431 = vmul.f32 %v343, %v419
    %v432 = vmul.f32 %v345, %v420
    %v433 = vmul.f32 %v347, %v420
    %v434 = vmul.f32 %v349, %v421
    %v435 = vmul.f32 %v351, %v421
    %v436 = vmul.f32 %v353, %v422
    %v437 = vmul.f32 %v355, %v422
    %v438 = vmul.f32 %v357, %v423
    %v439 = vmul.f32 %v359, %v423
    %v440 = vmul.f32 %v424, %v50
    %v441 = vmul.f32 %v425, %v51
    %v442 = vmul.f32 %v426, %v52
    %v443 = vmul.f32 %v427, %v53
    %v444 = vmul.f32 %v428, %v54
    %v445 = vmul.f32 %v429, %v55
    %v446 = vmul.f32 %v430, %v56
    %v447 = vmul.f32 %v431, %v57
    %v448 = vmul.f32 %v432, %v58
    %v449 = vmul.f32 %v433, %v59
    %v450 = vmul.f32 %v434, %v60
    %v451 = vmul.f32 %v435, %v61
    %v452 = vmul.f32 %v436, %v62
    %v453 = vmul.f32 %v437, %v63
    %v454 = vmul.f32 %v438, %v64
    %v455 = vmul.f32 %v439, %v65
    %v456 = vsel %vm74, %v440, 0.0
    %v457 = vsel %vm74, %v441, 0.0
    %v458 = vadd.f32 %v456, %v457
    %v459 = vrot.slane %v458, 4
    %v460 = vadd.f32 %v458, %v459
    %v461 = vrot.slane %v460, 2
    %v462 = vadd.f32 %v460, %v461
    %v463 = vrot.slane %v462, 1
    %v464 = vadd.f32 %v462, %v463
    %v465 = vsel %vm74, %v442, 0.0
    %v466 = vsel %vm74, %v443, 0.0
    %v467 = vadd.f32 %v465, %v466
    %v468 = vrot.slane %v467, 4
    %v469 = vadd.f32 %v467, %v468
    %v470 = vrot.slane %v469, 2
    %v471 = vadd.f32 %v469, %v470
    %v472 = vrot.slane %v471, 1
    %v473 = vadd.f32 %v471, %v472
    %v474 = vsel %vm74, %v444, 0.0
    %v475 = vsel %vm74, %v445, 0.0
    %v476 = vadd.f32 %v474, %v475
    %v477 = vrot.slane %v476, 4
    %v478 = vadd.f32 %v476, %v477
    %v479 = vrot.slane %v478, 2
    %v480 = vadd.f32 %v478, %v479
    %v481 = vrot.slane %v480, 1
    %v482 = vadd.f32 %v480, %v481
    %v483 = vsel %vm74, %v446, 0.0
    %v484 = vsel %vm74, %v447, 0.0
    %v485 = vadd.f32 %v483, %v484
    %v486 = vrot.slane %v485, 4
    %v487 = vadd.f32 %v485, %v486
    %v488 = vrot.slane %v487, 2
    %v489 = vadd.f32 %v487, %v488
    %v490 = vrot.slane %v489, 1
    %v491 = vadd.f32 %v489, %v490
    %v492 = vsel %vm74, %v448, 0.0
    %v493 = vsel %vm74, %v449, 0.0
    %v494 = vadd.f32 %v492, %v493
    %v495 = vrot.slane %v494, 4
    %v496 = vadd.f32 %v494, %v495
    %v497 = vrot.slane %v496, 2
    %v498 = vadd.f32 %v496, %v497
    %v499 = vrot.slane %v498, 1
    %v500 = vadd.f32 %v498, %v499
    %v501 = vsel %vm74, %v450, 0.0
    %v502 = vsel %vm74, %v451, 0.0
    %v503 = vadd.f32 %v501, %v502
    %v504 = vrot.slane %v503, 4
    %v505 = vadd.f32 %v503, %v504
    %v506 = vrot.slane %v505, 2
    %v507 = vadd.f32 %v505, %v506
    %v508 = vrot.slane %v507, 1
    %v509 = vadd.f32 %v507, %v508
    %v510 = vsel %vm74, %v452, 0.0
    %v511 = vsel %vm74, %v453, 0.0
    %v512 = vadd.f32 %v510, %v511
    %v513 = vrot.slane %v512, 4
    %v514 = vadd.f32 %v512, %v513
    %v515 = vrot.slane %v514, 2
    %v516 = vadd.f32 %v514, %v515
    %v517 = vrot.slane %v516, 1
    %v518 = vadd.f32 %v516, %v517
    %v519 = vsel %vm74, %v454, 0.0
    %v520 = vsel %vm74, %v455, 0.0
    %v521 = vadd.f32 %v519, %v520
    %v522 = vrot.slane %v521, 4
    %v523 = vadd.f32 %v521, %v522
    %v524 = vrot.slane %v523, 2
    %v525 = vadd.f32 %v523, %v524
    %v526 = vrot.slane %v525, 1
    %v527 = vadd.f32 %v525, %v526
    %vm536 = vcmask 1041409
    %v537 = vsel %vm536, %v473, %v464
    %vm538 = vcmask 1042434
    %v539 = vsel %vm538, %v482, %v537
    %vm540 = vcmask 1043459
    %v541 = vsel %vm540, %v491, %v539
    %vm542 = vcmask 1044484
    %v543 = vsel %vm542, %v500, %v541
    %vm544 = vcmask 1045509
    %v545 = vsel %vm544, %v509, %v543
    %vm546 = vcmask 1046534
    %v547 = vsel %vm546, %v518, %v545
    %vm548 = vcmask 1047559
    %v549 = vsel %vm548, %v527, %v547
    %551 = vst.msk [vmem:[#allocation7] sm:$0xff] %vm74, %v549
    // Predicated region
    $region26: #{tpu_custom_call.1} parent=1 // pred_check
      _
    $region27: #{tpu_custom_call.1} parent=1 // pred_check_branch
      %553 = sbr.rel (0) target = $region29
    $region28: #{tpu_custom_call.1} parent=1 // pred_region
      %555 = vsyncadd [#allocation4], 0
      %s557 = sshll.u32 [#allocation7], 4
      %s558 = int_to_ptr.vmem [resolvable:$true] %s557
      %s559 = sshll.u32 %s4, 4
      %s560 = int_to_ptr.hbm [resolvable:$true] %s559
      %562 = dma.vmem_to_hbm [thread:$0]  %s558, 128, %s560, [#allocation4]
    $region29: #{tpu_custom_call.1} parent=1 // pred_fallthru
      _
    // Predicated region
    $region30: #{tpu_custom_call.1} parent=1 // pred_check
      _
    $region31: #{tpu_custom_call.1} parent=1 // pred_check_branch
      %564 = sbr.rel (0) target = $region33
    $region32: #{tpu_custom_call.1} parent=1 // pred_region
      %566 = dma.done [#allocation4], 128
    $region33: #{tpu_custom_call.1} parent=1 // pred_fallthru
      _
    %567 = vsyncpa [#allocation3], 1
    %568 = vsyncpa [#allocation6], 1
    %569 = vsyncpa [#allocation4], 1

</llo_original>
